<compile_context>
chip_gen: v6e
topology: v6e:2x2x1
jax: 0.10.0
libtpu: 0.0.40
codegen_flags: <defaults>
</compile_context>

<pallas_src>
import functools

import jax
import jax.numpy as jnp
from jax.experimental import pallas as pl
from jax.experimental.pallas import tpu as pltpu

# Batches at or below this size skip the grid/pipeline machinery entirely.
_GRIDLESS_MAX_B = 256


def _linear_kernel_small(x_ref, wt_ref, b_ref, o_ref):
    """Gridless small-batch kernel: y = x @ W_t + b (W pre-transposed to (IN, OUT))."""
    # x_ref: (B, IN), wt_ref: (IN, OUT), b_ref: (1, OUT), o_ref: (B, OUT)
    acc = jnp.dot(x_ref[...], wt_ref[...], preferred_element_type=jnp.float32)
    o_ref[...] = (acc + b_ref[...]).astype(o_ref.dtype)


def _linear_kernel_lanedense(xt_ref, w_ref, b_ref, ot_ref):
    """Lane-dense tiled kernel: y^T = W @ x^T + b (batch on lanes)."""
    # xt_ref: (IN, TBL), w_ref: (OUT, IN), b_ref: (OUT, 1), ot_ref: (OUT, TBL)
    acc = jnp.dot(w_ref[...], xt_ref[...], preferred_element_type=jnp.float32)
    ot_ref[...] = (acc + b_ref[...]).astype(ot_ref.dtype)


@functools.partial(jax.jit, static_argnames=("block_b",))
def linear_pallas(x, weight, bias, *, block_b=32768):
    """y = x @ weight.T + bias, matching torch.nn.Linear semantics.

    x:      (B, IN)   float32
    weight: (OUT, IN) float32  (PyTorch convention — NOT pre-transposed)
    bias:   (OUT,)    float32
    """
    B, IN = x.shape
    OUT = weight.shape[0]

    if B <= _GRIDLESS_MAX_B:
        # Small batch (the module's production case): single shot, no grid,
        # no pipeline bookkeeping. W^T is a one-time 200-byte wrapper op.
        return pl.pallas_call(
            _linear_kernel_small,
            out_shape=jax.ShapeDtypeStruct((B, OUT), x.dtype),
            in_specs=[
                pl.BlockSpec(memory_space=pltpu.MemorySpace.VMEM),
                pl.BlockSpec(memory_space=pltpu.MemorySpace.VMEM),
                pl.BlockSpec(memory_space=pltpu.MemorySpace.VMEM),
            ],
            out_specs=pl.BlockSpec(memory_space=pltpu.MemorySpace.VMEM),
        )(x, weight.T, bias.reshape(1, OUT))

    # Large batch: lane-dense tiling (batch on lanes). Tile width must be a
    # multiple of 128 lanes; no batch padding/slicing — Pallas clips the
    # partial last block, and garbage columns in it are harmless because each
    # output column depends only on its own input column.
    tbl = max(128, ((block_b + 127) // 128) * 128)
    tbl = min(tbl, ((B + 127) // 128) * 128)

    x_t = x.T                      # (IN, B)  — wrapper-side layout plumbing
    b_col = bias.reshape(OUT, 1)   # broadcasts across batch lanes

    out_t = pl.pallas_call(
        _linear_kernel_lanedense,
        out_shape=jax.ShapeDtypeStruct((OUT, B), x.dtype),
        grid=(pl.cdiv(B, tbl),),
        in_specs=[
            pl.BlockSpec((IN, tbl), lambda i: (0, i)),
            pl.BlockSpec((OUT, IN), lambda i: (0, 0)),  # resident across tiles
            pl.BlockSpec((OUT, 1), lambda i: (0, 0)),   # resident across tiles
        ],
        out_specs=pl.BlockSpec((OUT, tbl), lambda i: (0, i)),
        compiler_params=pltpu.CompilerParams(
            dimension_semantics=("parallel",),  # shard batch tiles across TCs (v7x)
            vmem_limit_bytes=32 * 1024 * 1024,
        ),
    )(x_t, weight, b_col)
    return out_t.T


if __name__ == "__main__":
    key = jax.random.PRNGKey(0)
    k_x, k_w, k_b, k_x2 = jax.random.split(key, 4)

    B, IN, OUT = 8, 10, 5

    x = jax.random.normal(k_x, (B, IN), dtype=jnp.float32)
    # Deterministic parameter init (mimic nn.Linear uniform(-1/sqrt(IN), 1/sqrt(IN)))
    bound = 1.0 / jnp.sqrt(jnp.float32(IN))
    weight = jax.random.uniform(k_w, (OUT, IN), minval=-bound, maxval=bound,
                                dtype=jnp.float32)
    bias = jax.random.uniform(k_b, (OUT,), minval=-bound, maxval=bound,
                              dtype=jnp.float32)

    # Small-batch (gridless) path — matches the module's forward pass.
    y = jax.block_until_ready(linear_pallas(x, weight, bias))
    y_ref = x @ weight.T + bias
    assert y.shape == (B, OUT)
    assert jnp.allclose(y, y_ref, atol=1e-5, rtol=1e-5)

    # Exercise the lane-dense tiled path, including a partial last block
    # (600 = 4 full 128-lane tiles + one 88-lane partial tile).
    B2 = 600
    x2 = jax.random.normal(k_x2, (B2, IN), dtype=jnp.float32)
    y2 = jax.block_until_ready(linear_pallas(x2, weight, bias, block_b=128))
    y2_ref = x2 @ weight.T + bias
    assert y2.shape == (B2, OUT)
    assert jnp.allclose(y2, y2_ref, atol=1e-5, rtol=1e-5)

    print("KERNEL_OK")
</pallas_src>

<mosaic_0001>
module attributes {stable_mosaic.version = 11 : i64} {
  func.func @_linear_kernel_small(%arg0: memref<8x10xf32, #tpu.memory_space<vmem>>, %arg1: memref<10x5xf32, #tpu.memory_space<vmem>>, %arg2: memref<1x5xf32, #tpu.memory_space<vmem>>, %arg3: memref<8x5xf32, #tpu.memory_space<vmem>>) attributes {dimension_semantics = [], scalar_prefetch = 0 : i64, scratch_operands = 0 : i64, tpu.core_type = #tpu.core_type<tc>} {
    %c0 = arith.constant 0 : index
    %c0_0 = arith.constant 0 : index
    %0 = vector.load %arg0[%c0, %c0_0] : memref<8x10xf32, #tpu.memory_space<vmem>>, vector<8x10xf32>
    %c0_1 = arith.constant 0 : index
    %c0_2 = arith.constant 0 : index
    %1 = vector.load %arg1[%c0_1, %c0_2] : memref<10x5xf32, #tpu.memory_space<vmem>>, vector<10x5xf32>
    %cst = arith.constant dense<0.000000e+00> : vector<8x5xf32>
    %2 = tpu.matmul %0, %1, %cst {dimension_numbers = #tpu.dot_dimension_numbers<[1], [0], [0], [1], [0, 0, 1, 1], [], []>} : vector<8x10xf32>, vector<10x5xf32>, vector<8x5xf32> -> vector<8x5xf32>
    %c0_3 = arith.constant 0 : index
    %c0_4 = arith.constant 0 : index
    %3 = vector.load %arg2[%c0_3, %c0_4] : memref<1x5xf32, #tpu.memory_space<vmem>>, vector<1x5xf32>
    %4 = vector.broadcast %3 : vector<1x5xf32> to vector<8x5xf32>
    %5 = arith.addf %2, %4 : vector<8x5xf32>
    %c0_5 = arith.constant 0 : index
    %c0_6 = arith.constant 0 : index
    %6 = vector.load %arg3[%c0_5, %c0_6] : memref<8x5xf32, #tpu.memory_space<vmem>>, vector<8x5xf32>
    tpu.vector_store %arg3[%c0_5, %c0_6], %5 {strides = array<i32>} : memref<8x5xf32, #tpu.memory_space<vmem>>, vector<8x5xf32>,
    return
  }
}

</mosaic_0001>

<llo_original>
// kernel: linear_pallas.1
$region0: #{linear_pallas.1}
  #allocation0 [shape = 'u32[]', space=smem, size = 0x4, offset = 0x4, fixed_abs, tag = 'smem constant byte address 0x4 - core index']
  #allocation1 [shape = 'u32[144,128]{1,0:T(1,128)}', space=vmem, size = 0x12000, scoped, tag = 'internal scratch']
  %s0 = inlined_call_operand.vmem [shape: f32[8,10], index: 0, kind: input, shape index: {}]
  %s1 = inlined_call_operand.vmem [shape: f32[10,5], index: 1, kind: input, shape index: {}]
  %s2 = inlined_call_operand.vmem [shape: f32[1,5], index: 2, kind: input, shape index: {}]
  %s3 = inlined_call_operand.hbm [shape: f32[8,5], index: 3, kind: output, shape index: {}]
  %s4 = sld [smem:[#allocation0]]
  $region22: #{linear_pallas.1} parent=0
    _
  %s6 = ssub.s32 1, %s4
  %s7 = scalar_select 0, %s6, %s4
  $region1: #{linear_pallas.1} parent=0
    #allocation2 [shape = 'u8[4096]{0}', space=vmem, size = 0x1000, scoped, tag = 'output window, operand 0, single buffered']
    #allocation3 [shape = 's32[1]{0}', space=sflag, size = 0x4, scoped, tag = 'scoped memory for linear_pallas.1']
    %8 = vsyncpa [#allocation3], 0
    // Predicated region
    $region2: #{linear_pallas.1} parent=1 // pred_check
      _
    $region3: #{linear_pallas.1} parent=1 // pred_check_branch
      %10 = sbr.rel (0) target = $region5
    $region4: #{linear_pallas.1} parent=1 // pred_region
      _
    $region5: #{linear_pallas.1} parent=1 // pred_fallthru
      _
    // Predicated region
    $region6: #{linear_pallas.1} parent=1 // pred_check
      _
    $region7: #{linear_pallas.1} parent=1 // pred_check_branch
      %12 = sbr.rel (0) target = $region9
    $region8: #{linear_pallas.1} parent=1 // pred_region
      _
    $region9: #{linear_pallas.1} parent=1 // pred_fallthru
      _
    // Predicated region
    $region10: #{linear_pallas.1} parent=1 // pred_check
      _
    $region11: #{linear_pallas.1} parent=1 // pred_check_branch
      %14 = sbr.rel (0) target = $region13
    $region12: #{linear_pallas.1} parent=1 // pred_region
      _
    $region13: #{linear_pallas.1} parent=1 // pred_fallthru
      _
    %v15 = vld [vmem:[%s0] sm:$0xff]
    %v16 = vld [vmem:[%s1] sm:$0xff]
    %v17 = vld [vmem:[%s1 + $0x8] sm:$0x3]
    %v18 = vld [vmem:[%s2] sm:$0x1]
    %v20 = vlaneseq
    %v21 = vshrl.u32 %v20, 7
    %v22 = vsub.s32 0, %v21
    %v23 = vrot.slane %v18, %v22
    %vm25 = vcmask 80896
    %v27 = vsel %vm25, %v15, 0
    %vm29 = vcmask 1041408
    %v31 = vsel %vm29, %v17, 0
    %33 = vmatprep.subr.mxu0 0.0
    %34 = vmatpush1.msra.mxu0 0.0
    %35 = vmatprep.subr.mxu0 0.0
    %36 = vmatpush1.msra.mxu0 0.0
    %37 = vmatprep.subr.mxu0 0.0
    %38 = vmatpush1.msra.mxu0 0.0
    %39 = vmatprep.subr.mxu0 0.0
    %40 = vmatpush1.msra.mxu0 0.0
    %41 = vmatprep.subr.mxu0 0.0
    %42 = vmatpush1.msra.mxu0 0.0
    %43 = vmatprep.subr.mxu0 0.0
    %44 = vmatpush1.msra.mxu0 0.0
    %45 = vmatprep.subr.mxu0 0.0
    %46 = vmatpush1.msra.mxu0 0.0
    %47 = vmatprep.subr.mxu0 0.0
    %48 = vmatpush1.msra.mxu0 0.0
    %49 = vmatprep.subr.mxu0 0.0
    %50 = vmatpush1.msra.mxu0 0.0
    %51 = vmatprep.subr.mxu0 0.0
    %52 = vmatpush1.msra.mxu0 0.0
    %53 = vmatprep.subr.mxu0 0.0
    %54 = vmatpush1.msra.mxu0 0.0
    %55 = vmatprep.subr.mxu0 0.0
    %56 = vmatpush1.msra.mxu0 0.0
    %57 = vmatprep.subr.mxu0 0.0
    %58 = vmatpush1.msra.mxu0 0.0
    %59 = vmatprep.subr.mxu0 0.0
    %60 = vmatpush1.msra.mxu0 0.0
    %61 = vmatprep.subr.mxu0 0.0
    %62 = vmatpush1.msra.mxu0 %v31
    %63 = vmatprep.subr.mxu0 0.0
    %64 = vmatpush1.msra.mxu0 %v16
    %65 = vmatprep.subr.mxu0 0.0
    %66 = vmatpush2.msra.mxu0 0.0
    %67 = vmatprep.subr.mxu0 0.0
    %68 = vmatpush2.msra.mxu0 0.0
    %69 = vmatprep.subr.mxu0 0.0
    %70 = vmatpush2.msra.mxu0 0.0
    %71 = vmatprep.subr.mxu0 0.0
    %72 = vmatpush2.msra.mxu0 0.0
    %73 = vmatprep.subr.mxu0 0.0
    %74 = vmatpush2.msra.mxu0 0.0
    %75 = vmatprep.subr.mxu0 0.0
    %76 = vmatpush2.msra.mxu0 0.0
    %77 = vmatprep.subr.mxu0 0.0
    %78 = vmatpush2.msra.mxu0 0.0
    %79 = vmatprep.subr.mxu0 0.0
    %80 = vmatpush2.msra.mxu0 0.0
    %81 = vmatprep.subr.mxu0 0.0
    %82 = vmatpush2.msra.mxu0 0.0
    %83 = vmatprep.subr.mxu0 0.0
    %84 = vmatpush2.msra.mxu0 0.0
    %85 = vmatprep.subr.mxu0 0.0
    %86 = vmatpush2.msra.mxu0 0.0
    %87 = vmatprep.subr.mxu0 0.0
    %88 = vmatpush2.msra.mxu0 0.0
    %89 = vmatprep.subr.mxu0 0.0
    %90 = vmatpush2.msra.mxu0 0.0
    %91 = vmatprep.subr.mxu0 0.0
    %92 = vmatpush2.msra.mxu0 0.0
    %93 = vmatprep.subr.mxu0 0.0
    %94 = vmatpush2.msra.mxu0 0.0
    %95 = vmatprep.subr.mxu0 0.0
    %96 = vmatpush2.msra.mxu0 0.0
    %97 = vmatprep.mubr.f32.mxu0 0.0
    %98 = vmatmul.mubr.f32.gmra.mxu0 %v27
    %v99 = vpop.f32.mrf.mxu0
    %v100 = vadd.f32 %v23, %v99
    %v101 = vpop.f32.mrf.mxu0
    %102 = vdwg.mxu0
    %vm103 = vcmask 39936
    %104 = vst.msk [vmem:[#allocation2] sm:$0xff] %vm103, %v100
    // Predicated region
    $region14: #{linear_pallas.1} parent=1 // pred_check
      _
    $region15: #{linear_pallas.1} parent=1 // pred_check_branch
      %106 = sbr.rel (0) target = $region17
    $region16: #{linear_pallas.1} parent=1 // pred_region
      %s108 = ssub.s32 128, 128
      %109 = vsyncadd [#allocation3], %s108
      %s111 = sshll.u32 [#allocation2], 4
      %s112 = int_to_ptr.vmem [resolvable:$true] %s111
      %114 = dma.vmem_to_hbm [thread:$0]  %s112, 128, %s3, [#allocation3]
    $region17: #{linear_pallas.1} parent=1 // pred_fallthru
      _
    // Predicated region
    $region18: #{linear_pallas.1} parent=1 // pred_check
      _
    $region19: #{linear_pallas.1} parent=1 // pred_check_branch
      %116 = sbr.rel (0) target = $region21
    $region20: #{linear_pallas.1} parent=1 // pred_region
      %117 = dma.done [#allocation3], 128
    $region21: #{linear_pallas.1} parent=1 // pred_fallthru
      _
    %118 = vsyncpa [#allocation3], 1

</llo_original>
